<compile_context>
chip_gen: v6e
topology: v6e:2x2x1
jax: 0.10.0
libtpu: 0.0.40
codegen_flags: <defaults>
</compile_context>

<pallas_src>
import functools

import jax
import jax.numpy as jnp
from jax.experimental import pallas as pl
from jax.experimental.pallas import tpu as pltpu


def _encoder_kernel(x_ref, cw_ref, cb_ref, gamma_ref, beta_ref, ew_ref, eb_ref,
                    out_ref, feat_ref, *, batch, c_in, hw_total):
    # x_ref:     (B*Cin, hw_tile)  bf16  -- lane-dense spatial tile (streamed)
    # cw_ref:    (Cin, F)          f32   -- stand-in 1x1 conv weight (resident)
    # cb_ref:    (1, F)            f32   -- stand-in conv bias
    # gamma_ref: (1, F)            f32   -- BatchNorm2d weight
    # beta_ref:  (1, F)            f32   -- BatchNorm2d bias
    # ew_ref:    (F, E_pad)        bf16  -- embed Linear weight (resident)
    # eb_ref:    (1, E_pad)        f32   -- embed Linear bias
    # out_ref:   (B, E_pad)        f32
    # feat_ref:  (B, F)            f32 scratch: running pooled-sum accumulator
    t = pl.program_id(0)

    @pl.when(t == 0)
    def _init():
        feat_ref[...] = jnp.zeros_like(feat_ref)

    # Upcast once (keep VPU math in f32; v5e has no bf16 VALU) and put the
    # spatial axis on sublanes so the Cin-deep contraction is a canonical MXU
    # matmul.  Transposing the small (B*Cin, hw_tile) tile is cheap XLU work.
    x_t = jnp.transpose(x_ref[...].astype(jnp.float32), (1, 0))  # (hw_tile, B*Cin)

    for b in range(batch):                            # unrolled; B is small
        # (hw_tile, Cin) @ (Cin, F) on the MXU with f32 accumulation.
        z = jnp.dot(x_t[:, b * c_in:(b + 1) * c_in], cw_ref[...],
                    preferred_element_type=jnp.float32)           # (hw_tile, F)
        z = jnp.maximum(z + cb_ref[...], 0.0)                     # bias + ReLU
        # Reduce the tile NOW: only a (B, F) accumulator survives across steps.
        feat_ref[b:b + 1, :] += jnp.sum(z, axis=0, keepdims=True)

    @pl.when(t == pl.num_programs(0) - 1)
    def _finalize():
        feats = feat_ref[...] * (1.0 / float(hw_total))           # global avg pool

        # BatchNorm2d (training mode): batch stats, biased variance, eps=1e-5.
        mean = jnp.mean(feats, axis=0, keepdims=True)             # (1, F)
        var = jnp.mean(feats * feats, axis=0, keepdims=True) - mean * mean
        var = jnp.maximum(var, 0.0)        # guard E[x^2]-mean^2 cancellation
        y = (feats - mean) * jax.lax.rsqrt(var + 1e-5)
        y = y * gamma_ref[...] + beta_ref[...]                    # (B, F)

        # Embed Linear on the MXU: bf16 operands, f32 accumulation; lane-dense
        # (E padded to a multiple of 128) output store.
        out_ref[...] = jnp.dot(y.astype(jnp.bfloat16), ew_ref[...],
                               preferred_element_type=jnp.float32) + eb_ref[...]


def _round_up(x, m):
    return ((x + m - 1) // m) * m


def _vmem_tile_bytes(shape, dtype):
    """Bytes of one VMEM buffer after (sublane, lane) tile padding."""
    itemsize = jnp.dtype(dtype).itemsize
    sublane = {4: 8, 2: 16, 1: 32}.get(itemsize, 8)
    shape = tuple(int(d) for d in shape)
    if len(shape) < 2:
        shape = (1,) * (2 - len(shape)) + shape
    lead = 1
    for d in shape[:-2]:
        lead *= d
    return lead * _round_up(shape[-2], sublane) * _round_up(shape[-1], 128) * itemsize


def _pick_hw_tile(hw_total, feat_dim, target=2048, inter_budget=16 * 1024 * 1024):
    """Largest multiple-of-128 divisor of hw_total <= target, with the per-tile
    (hw_tile, F) f32 conv intermediate bounded by inter_budget."""
    cap = max(128, (inter_budget // (4 * feat_dim)) // 128 * 128)
    target = min(target, cap)
    if hw_total <= target:
        return hw_total
    t = (target // 128) * 128
    while t >= 128:
        if hw_total % t == 0:
            return t
        t -= 128
    return hw_total


def encoder_cnn_forward(images_nchw, params, *, hw_tile=None):
    B, C, H, W = images_nchw.shape
    HW = H * W

    conv_w = params["conv_w"].astype(jnp.float32)          # (Cin, F)
    feat = conv_w.shape[1]
    embed_w = params["embed_w"]                             # (F, E)
    E = embed_w.shape[1]
    E_pad = max(128, _round_up(E, 128))

    # Pad embed weight/bias so the output store is lane-dense (>=128 lanes).
    ew = jnp.zeros((feat, E_pad), jnp.bfloat16).at[:, :E].set(
        embed_w.astype(jnp.bfloat16))
    eb = jnp.zeros((1, E_pad), jnp.float32).at[:, :E].set(
        params["embed_b"].reshape(1, E).astype(jnp.float32))

    cb = params["conv_b"].reshape(1, feat).astype(jnp.float32)
    gamma = params["bn_gamma"].reshape(1, feat).astype(jnp.float32)
    beta = params["bn_beta"].reshape(1, feat).astype(jnp.float32)

    if hw_tile is None:
        hw_tile = _pick_hw_tile(HW, feat)
    assert HW % hw_tile == 0, "H*W must be divisible by hw_tile"
    assert hw_tile % 128 == 0 or hw_tile == HW, "hw_tile must be lane-aligned"

    # NCHW -> [B*Cin, H*W]: spatial on the lane axis; bf16 halves HBM traffic.
    x2d = images_nchw.reshape(B * C, HW).astype(jnp.bfloat16)

    kernel = functools.partial(_encoder_kernel, batch=B, c_in=C, hw_total=HW)
    n_steps = HW // hw_tile

    # VMEM budget from actual padded footprints (double-buffered streamed/param
    # tiles, feat accumulator, per-tile f32 intermediates) with 2x headroom,
    # floored at the previously-validated 32 MiB and capped at 64 MiB (v7x-safe).
    footprint = (
        2 * _vmem_tile_bytes((B * C, hw_tile), jnp.bfloat16)   # streamed input
        + 2 * _vmem_tile_bytes((C, feat), jnp.float32)         # conv weight
        + 2 * 3 * _vmem_tile_bytes((1, feat), jnp.float32)     # cb, gamma, beta
        + 2 * _vmem_tile_bytes((feat, E_pad), jnp.bfloat16)    # embed weight
        + 2 * _vmem_tile_bytes((1, E_pad), jnp.float32)        # embed bias
        + 2 * _vmem_tile_bytes((B, E_pad), jnp.float32)        # output
        + _vmem_tile_bytes((B, feat), jnp.float32)             # feat accumulator
        + 2 * _vmem_tile_bytes((hw_tile, feat), jnp.float32)   # conv z intermediate
        + _vmem_tile_bytes((hw_tile, B * C), jnp.float32))     # transposed tile
    vmem_limit = int(min(64 * 1024 * 1024, max(2 * footprint, 32 * 1024 * 1024)))

    out_padded = pl.pallas_call(
        kernel,
        out_shape=jax.ShapeDtypeStruct((B, E_pad), jnp.float32),
        grid=(n_steps,),
        in_specs=[
            pl.BlockSpec((B * C, hw_tile), lambda t: (0, t)),   # streamed spatial tiles
            pl.BlockSpec((C, feat), lambda t: (0, 0)),          # params stay resident
            pl.BlockSpec((1, feat), lambda t: (0, 0)),
            pl.BlockSpec((1, feat), lambda t: (0, 0)),
            pl.BlockSpec((1, feat), lambda t: (0, 0)),
            pl.BlockSpec((feat, E_pad), lambda t: (0, 0)),
            pl.BlockSpec((1, E_pad), lambda t: (0, 0)),
        ],
        out_specs=pl.BlockSpec((B, E_pad), lambda t: (0, 0)),
        scratch_shapes=[
            pltpu.VMEM((B, feat), jnp.float32),                 # pooled-sum accumulator
        ],
        compiler_params=pltpu.CompilerParams(
            # Spatial axis is a reduction into a resident accumulator.
            dimension_semantics=("arbitrary",),
            vmem_limit_bytes=vmem_limit,
        ),
    )(x2d, conv_w, cb, gamma, beta, ew, eb)

    return out_padded[:, :E]                                    # (B, embed_size)


def make_params(key, c_in, feat_dim, embed_size):
    k1, k2 = jax.random.split(key, 2)
    return {
        # stand-in backbone (1x1 conv) weights, laid out (Cin, F)
        "conv_w": jax.random.normal(k1, (c_in, feat_dim), jnp.float32) * 0.1,
        "conv_b": jnp.zeros((feat_dim,), jnp.float32),
        # BatchNorm2d default init: weight=1, bias=0
        "bn_gamma": jnp.ones((feat_dim,), jnp.float32),
        "bn_beta": jnp.zeros((feat_dim,), jnp.float32),
        # Linear(feat_dim, embed_size)
        "embed_w": jax.random.normal(k2, (feat_dim, embed_size), jnp.float32) * 0.05,
        "embed_b": jnp.zeros((embed_size,), jnp.float32),
    }


if __name__ == "__main__":
    key = jax.random.PRNGKey(0)
    k_img, k_par = jax.random.split(key)

    B, C, H, W = 2, 4, 16, 16   # small NCHW image batch
    FEAT = 256                  # stand-in for resnet.fc.in_features (2048 in resnet50)
    EMBED = 32                  # embed_size (padded to 128 lanes inside, sliced back)

    images = jax.random.normal(k_img, (B, C, H, W), jnp.float32)
    params = make_params(k_par, C, FEAT, EMBED)

    # hw_tile=128 -> 2 grid steps, exercising the cross-step (B, F) accumulation.
    out = encoder_cnn_forward(images, params, hw_tile=128)
    out = jax.block_until_ready(out)
    assert out.shape == (B, EMBED) and out.dtype == jnp.float32
    print("KERNEL_OK")
</pallas_src>

<mosaic_0001>
module attributes {stable_mosaic.version = 11 : i64} {
  func.func @_encoder_kernel(%arg0: i32, %arg1: memref<8x128xbf16, #tpu.memory_space<vmem>>, %arg2: memref<4x256xf32, #tpu.memory_space<vmem>>, %arg3: memref<1x256xf32, #tpu.memory_space<vmem>>, %arg4: memref<1x256xf32, #tpu.memory_space<vmem>>, %arg5: memref<1x256xf32, #tpu.memory_space<vmem>>, %arg6: memref<256x128xbf16, #tpu.memory_space<vmem>>, %arg7: memref<1x128xf32, #tpu.memory_space<vmem>>, %arg8: memref<2x128xf32, #tpu.memory_space<vmem>>, %arg9: memref<2x256xf32, #tpu.memory_space<vmem>>) attributes {dimension_semantics = [#tpu.dimension_semantics<arbitrary>], iteration_bounds = array<i64: 2>, scalar_prefetch = 0 : i64, scratch_operands = 1 : i64, tpu.core_type = #tpu.core_type<tc>, window_params = [{transform_indices = @transform_0, window_bounds = array<i64: 8, 128>}, {pipeline_mode = #tpu.pipeline_mode<synchronous>, transform_indices = @transform_1, window_bounds = array<i64: 4, 256>}, {pipeline_mode = #tpu.pipeline_mode<synchronous>, transform_indices = @transform_2, window_bounds = array<i64: 1, 256>}, {pipeline_mode = #tpu.pipeline_mode<synchronous>, transform_indices = @transform_3, window_bounds = array<i64: 1, 256>}, {pipeline_mode = #tpu.pipeline_mode<synchronous>, transform_indices = @transform_4, window_bounds = array<i64: 1, 256>}, {pipeline_mode = #tpu.pipeline_mode<synchronous>, transform_indices = @transform_5, window_bounds = array<i64: 256, 128>}, {pipeline_mode = #tpu.pipeline_mode<synchronous>, transform_indices = @transform_6, window_bounds = array<i64: 1, 128>}, {pipeline_mode = #tpu.pipeline_mode<synchronous>, transform_indices = @transform_7, window_bounds = array<i64: 2, 128>}]} {
    %c0_i32 = arith.constant 0 : i32
    %0 = arith.cmpi eq, %arg0, %c0_i32 : i32
    %1 = arith.extui %0 : i1 to i32
    %c0_i32_0 = arith.constant 0 : i32
    %2 = arith.cmpi ne, %1, %c0_i32_0 : i32
    scf.if %2 {
      %cst_23 = arith.constant 0.000000e+00 : f32
      %35 = vector.broadcast %cst_23 : f32 to vector<2x256xf32>
      %c0_24 = arith.constant 0 : index
      %c0_25 = arith.constant 0 : index
      %36 = vector.load %arg9[%c0_24, %c0_25] : memref<2x256xf32, #tpu.memory_space<vmem>>, vector<2x256xf32>
      tpu.vector_store %arg9[%c0_24, %c0_25], %35 {strides = array<i32>} : memref<2x256xf32, #tpu.memory_space<vmem>>, vector<2x256xf32>,
    } else {
    }
    %c0 = arith.constant 0 : index
    %c0_1 = arith.constant 0 : index
    %3 = vector.load %arg1[%c0, %c0_1] : memref<8x128xbf16, #tpu.memory_space<vmem>>, vector<8x128xbf16>
    %4 = arith.extf %3 : vector<8x128xbf16> to vector<8x128xf32>
    %5 = tpu.transpose %4, [1, 0] : vector<8x128xf32> -> vector<128x8xf32>
    %6 = vector.extract_strided_slice %5 {offsets = [0, 0], sizes = [128, 4], strides = [1, 1]} : vector<128x8xf32> to vector<128x4xf32>
    %c0_2 = arith.constant 0 : index
    %c0_3 = arith.constant 0 : index
    %7 = vector.load %arg2[%c0_2, %c0_3] : memref<4x256xf32, #tpu.memory_space<vmem>>, vector<4x256xf32>
    %cst = arith.constant dense<0.000000e+00> : vector<128x256xf32>
    %8 = tpu.matmul %6, %7, %cst {dimension_numbers = #tpu.dot_dimension_numbers<[1], [0], [0], [1], [0, 0, 1, 1], [], []>} : vector<128x4xf32>, vector<4x256xf32>, vector<128x256xf32> -> vector<128x256xf32>
    %c0_4 = arith.constant 0 : index
    %c0_5 = arith.constant 0 : index
    %9 = vector.load %arg3[%c0_4, %c0_5] : memref<1x256xf32, #tpu.memory_space<vmem>>, vector<1x256xf32>
    %10 = vector.broadcast %9 : vector<1x256xf32> to vector<128x256xf32>
    %11 = arith.addf %8, %10 : vector<128x256xf32>
    %cst_6 = arith.constant 0.000000e+00 : f32
    %12 = vector.broadcast %cst_6 : f32 to vector<128x256xf32>
    %13 = arith.maximumf %11, %12 : vector<128x256xf32>
    %c0_7 = arith.constant 0 : index
    %c0_8 = arith.constant 0 : index
    %14 = vector.load %arg9[%c0_7, %c0_8] : memref<2x256xf32, #tpu.memory_space<vmem>>, vector<1x256xf32>
    %cst_9 = arith.constant dense<0.000000e+00> : vector<256xf32>
    %15 = vector.multi_reduction <add>, %13, %cst_9 [0] : vector<128x256xf32> to vector<256xf32>
    %16 = vector.shape_cast %15 : vector<256xf32> to vector<1x256xf32>
    %17 = arith.addf %14, %16 : vector<1x256xf32>
    %c0_10 = arith.constant 0 : index
    %c0_11 = arith.constant 0 : index
    %18 = vector.load %arg9[%c0_10, %c0_11] : memref<2x256xf32, #tpu.memory_space<vmem>>, vector<1x256xf32>
    tpu.vector_store %arg9[%c0_10, %c0_11], %17 {strides = array<i32>} : memref<2x256xf32, #tpu.memory_space<vmem>>, vector<1x256xf32>,
    %19 = vector.extract_strided_slice %5 {offsets = [0, 4], sizes = [128, 4], strides = [1, 1]} : vector<128x8xf32> to vector<128x4xf32>
    %c0_12 = arith.constant 0 : index
    %c0_13 = arith.constant 0 : index
    %20 = vector.load %arg2[%c0_12, %c0_13] : memref<4x256xf32, #tpu.memory_space<vmem>>, vector<4x256xf32>
    %cst_14 = arith.constant dense<0.000000e+00> : vector<128x256xf32>
    %21 = tpu.matmul %19, %20, %cst_14 {dimension_numbers = #tpu.dot_dimension_numbers<[1], [0], [0], [1], [0, 0, 1, 1], [], []>} : vector<128x4xf32>, vector<4x256xf32>, vector<128x256xf32> -> vector<128x256xf32>
    %c0_15 = arith.constant 0 : index
    %c0_16 = arith.constant 0 : index
    %22 = vector.load %arg3[%c0_15, %c0_16] : memref<1x256xf32, #tpu.memory_space<vmem>>, vector<1x256xf32>
    %23 = vector.broadcast %22 : vector<1x256xf32> to vector<128x256xf32>
    %24 = arith.addf %21, %23 : vector<128x256xf32>
    %cst_17 = arith.constant 0.000000e+00 : f32
    %25 = vector.broadcast %cst_17 : f32 to vector<128x256xf32>
    %26 = arith.maximumf %24, %25 : vector<128x256xf32>
    %c1 = arith.constant 1 : index
    %c0_18 = arith.constant 0 : index
    %27 = vector.load %arg9[%c1, %c0_18] : memref<2x256xf32, #tpu.memory_space<vmem>>, vector<1x256xf32>
    %cst_19 = arith.constant dense<0.000000e+00> : vector<256xf32>
    %28 = vector.multi_reduction <add>, %26, %cst_19 [0] : vector<128x256xf32> to vector<256xf32>
    %29 = vector.shape_cast %28 : vector<256xf32> to vector<1x256xf32>
    %30 = arith.addf %27, %29 : vector<1x256xf32>
    %c1_20 = arith.constant 1 : index
    %c0_21 = arith.constant 0 : index
    %31 = vector.load %arg9[%c1_20, %c0_21] : memref<2x256xf32, #tpu.memory_space<vmem>>, vector<1x256xf32>
    tpu.vector_store %arg9[%c1_20, %c0_21], %30 {strides = array<i32>} : memref<2x256xf32, #tpu.memory_space<vmem>>, vector<1x256xf32>,
    %c1_i32 = arith.constant 1 : i32
    %32 = arith.cmpi eq, %arg0, %c1_i32 : i32
    %33 = arith.extui %32 : i1 to i32
    %c0_i32_22 = arith.constant 0 : i32
    %34 = arith.cmpi ne, %33, %c0_i32_22 : i32
    scf.if %34 {
      %c0_23 = arith.constant 0 : index
      %c0_24 = arith.constant 0 : index
      %35 = vector.load %arg9[%c0_23, %c0_24] : memref<2x256xf32, #tpu.memory_space<vmem>>, vector<2x256xf32>
      %cst_25 = arith.constant 3.906250e-03 : f32
      %36 = vector.broadcast %cst_25 : f32 to vector<2x256xf32>
      %37 = arith.mulf %35, %36 : vector<2x256xf32>
      %cst_26 = arith.constant dense<0.000000e+00> : vector<256xf32>
      %38 = vector.multi_reduction <add>, %37, %cst_26 [0] : vector<2x256xf32> to vector<256xf32>
      %39 = vector.shape_cast %38 : vector<256xf32> to vector<1x256xf32>
      %cst_27 = arith.constant 2.000000e+00 : f32
      %40 = vector.broadcast %cst_27 : f32 to vector<1x256xf32>
      %41 = arith.divf %39, %40 : vector<1x256xf32>
      %42 = arith.mulf %37, %37 : vector<2x256xf32>
      %cst_28 = arith.constant dense<0.000000e+00> : vector<256xf32>
      %43 = vector.multi_reduction <add>, %42, %cst_28 [0] : vector<2x256xf32> to vector<256xf32>
      %44 = vector.shape_cast %43 : vector<256xf32> to vector<1x256xf32>
      %cst_29 = arith.constant 2.000000e+00 : f32
      %45 = vector.broadcast %cst_29 : f32 to vector<1x256xf32>
      %46 = arith.divf %44, %45 : vector<1x256xf32>
      %47 = arith.mulf %41, %41 : vector<1x256xf32>
      %48 = arith.subf %46, %47 : vector<1x256xf32>
      %cst_30 = arith.constant 0.000000e+00 : f32
      %49 = vector.broadcast %cst_30 : f32 to vector<1x256xf32>
      %50 = arith.maximumf %48, %49 : vector<1x256xf32>
      %51 = vector.broadcast %41 : vector<1x256xf32> to vector<2x256xf32>
      %52 = arith.subf %37, %51 : vector<2x256xf32>
      %cst_31 = arith.constant 9.99999974E-6 : f32
      %53 = vector.broadcast %cst_31 : f32 to vector<1x256xf32>
      %54 = arith.addf %50, %53 : vector<1x256xf32>
      %55 = math.rsqrt %54 : vector<1x256xf32>
      %56 = vector.broadcast %55 : vector<1x256xf32> to vector<2x256xf32>
      %57 = arith.mulf %52, %56 : vector<2x256xf32>
      %c0_32 = arith.constant 0 : index
      %c0_33 = arith.constant 0 : index
      %58 = vector.load %arg4[%c0_32, %c0_33] : memref<1x256xf32, #tpu.memory_space<vmem>>, vector<1x256xf32>
      %59 = vector.broadcast %58 : vector<1x256xf32> to vector<2x256xf32>
      %60 = arith.mulf %57, %59 : vector<2x256xf32>
      %c0_34 = arith.constant 0 : index
      %c0_35 = arith.constant 0 : index
      %61 = vector.load %arg5[%c0_34, %c0_35] : memref<1x256xf32, #tpu.memory_space<vmem>>, vector<1x256xf32>
      %62 = vector.broadcast %61 : vector<1x256xf32> to vector<2x256xf32>
      %63 = arith.addf %60, %62 : vector<2x256xf32>
      %64 = arith.truncf %63 : vector<2x256xf32> to vector<2x256xbf16>
      %c0_36 = arith.constant 0 : index
      %c0_37 = arith.constant 0 : index
      %65 = vector.load %arg6[%c0_36, %c0_37] : memref<256x128xbf16, #tpu.memory_space<vmem>>, vector<256x128xbf16>
      %cst_38 = arith.constant dense<0.000000e+00> : vector<2x128xf32>
      %66 = tpu.matmul %64, %65, %cst_38 {dimension_numbers = #tpu.dot_dimension_numbers<[1], [0], [0], [1], [0, 0, 1, 1], [], []>} : vector<2x256xbf16>, vector<256x128xbf16>, vector<2x128xf32> -> vector<2x128xf32>
      %c0_39 = arith.constant 0 : index
      %c0_40 = arith.constant 0 : index
      %67 = vector.load %arg7[%c0_39, %c0_40] : memref<1x128xf32, #tpu.memory_space<vmem>>, vector<1x128xf32>
      %68 = vector.broadcast %67 : vector<1x128xf32> to vector<2x128xf32>
      %69 = arith.addf %66, %68 : vector<2x128xf32>
      %c0_41 = arith.constant 0 : index
      %c0_42 = arith.constant 0 : index
      %70 = vector.load %arg8[%c0_41, %c0_42] : memref<2x128xf32, #tpu.memory_space<vmem>>, vector<2x128xf32>
      tpu.vector_store %arg8[%c0_41, %c0_42], %69 {strides = array<i32>} : memref<2x128xf32, #tpu.memory_space<vmem>>, vector<2x128xf32>,
    } else {
    }
    return
  }
  func.func @transform_0(%arg0: i32) -> (i32, i32) {
    %c0_i32 = arith.constant 0 : i32
    %c0_i32_0 = arith.constant 0 : i32
    return %c0_i32, %arg0 : i32, i32
  }
  func.func @transform_1(%arg0: i32) -> (i32, i32) {
    %c0_i32 = arith.constant 0 : i32
    %c0_i32_0 = arith.constant 0 : i32
    %c0_i32_1 = arith.constant 0 : i32
    return %c0_i32, %c0_i32_0 : i32, i32
  }
  func.func @transform_2(%arg0: i32) -> (i32, i32) {
    %c0_i32 = arith.constant 0 : i32
    %c0_i32_0 = arith.constant 0 : i32
    %c0_i32_1 = arith.constant 0 : i32
    return %c0_i32, %c0_i32_0 : i32, i32
  }
  func.func @transform_3(%arg0: i32) -> (i32, i32) {
    %c0_i32 = arith.constant 0 : i32
    %c0_i32_0 = arith.constant 0 : i32
    %c0_i32_1 = arith.constant 0 : i32
    return %c0_i32, %c0_i32_0 : i32, i32
  }
  func.func @transform_4(%arg0: i32) -> (i32, i32) {
    %c0_i32 = arith.constant 0 : i32
    %c0_i32_0 = arith.constant 0 : i32
    %c0_i32_1 = arith.constant 0 : i32
    return %c0_i32, %c0_i32_0 : i32, i32
  }
  func.func @transform_5(%arg0: i32) -> (i32, i32) {
    %c0_i32 = arith.constant 0 : i32
    %c0_i32_0 = arith.constant 0 : i32
    %c0_i32_1 = arith.constant 0 : i32
    return %c0_i32, %c0_i32_0 : i32, i32
  }
  func.func @transform_6(%arg0: i32) -> (i32, i32) {
    %c0_i32 = arith.constant 0 : i32
    %c0_i32_0 = arith.constant 0 : i32
    %c0_i32_1 = arith.constant 0 : i32
    return %c0_i32, %c0_i32_0 : i32, i32
  }
  func.func @transform_7(%arg0: i32) -> (i32, i32) {
    %c0_i32 = arith.constant 0 : i32
    %c0_i32_0 = arith.constant 0 : i32
    %c0_i32_1 = arith.constant 0 : i32
    return %c0_i32, %c0_i32_0 : i32, i32
  }
}

</mosaic_0001>

<llo_original>
// kernel: tpu_custom_call.1
$region0: #{tpu_custom_call.1}
  #allocation0 [shape = 'u32[]', space=smem, size = 0x4, offset = 0x4, fixed_abs, tag = 'smem constant byte address 0x4 - core index']
  #allocation1 [shape = 'u32[144,128]{1,0:T(1,128)}', space=vmem, size = 0x12000, scoped, tag = 'internal scratch']
  #allocation2 [shape = 'f32[2,256]{1,0:T(2,128)}', space=vmem, size = 0x800, scoped, tag = 'scratch operand']
  %s0 = inlined_call_operand.hbm [shape: bf16[8,256], index: 0, kind: input, shape index: {}]
  %s1 = inlined_call_operand.hbm [shape: f32[4,256], index: 1, kind: input, shape index: {}]
  %s2 = inlined_call_operand.vmem [shape: f32[1,256], index: 2, kind: input, shape index: {}]
  %s3 = inlined_call_operand.vmem [shape: f32[1,256], index: 3, kind: input, shape index: {}]
  %s4 = inlined_call_operand.vmem [shape: f32[1,256], index: 4, kind: input, shape index: {}]
  %s5 = inlined_call_operand.hbm [shape: bf16[256,128], index: 5, kind: input, shape index: {}]
  %s6 = inlined_call_operand.vmem [shape: f32[1,128], index: 6, kind: input, shape index: {}]
  %s7 = inlined_call_operand.hbm [shape: f32[2,128], index: 7, kind: output, shape index: {}]
  %s8 = sld [smem:[#allocation0]]
  $region81: #{tpu_custom_call.1} parent=0
    _
  %s10 = ssub.s32 1, %s8
  %s11 = scalar_select 0, %s10, %s8
  $region1: #{tpu_custom_call.1} parent=0
    #allocation3 [shape = 'u8[4096]{0}', space=vmem, size = 0x1000, scoped, tag = 'input window, operand 0']
    #allocation4 [shape = 's32[2]{0}', space=sflag, size = 0x8, scoped, tag = 'scoped memory for tpu_custom_call.1']
    #allocation5 [shape = 's32[2]{0}', space=sflag, size = 0x8, scoped, tag = 'scoped memory for tpu_custom_call.1']
    #allocation6 [shape = 'u8[4096]{0}', space=vmem, size = 0x1000, scoped, tag = 'input window, operand 1, single buffered']
    #allocation7 [shape = 's32[1]{0}', space=sflag, size = 0x4, scoped, tag = 'scoped memory for tpu_custom_call.1']
    #allocation8 [shape = 'u8[65536]{0}', space=vmem, size = 0x10000, scoped, tag = 'input window, operand 5, single buffered']
    #allocation9 [shape = 'u8[1024]{0}', space=vmem, size = 0x400, scoped, tag = 'output window, operand 0, single buffered']
    %12 = vsyncpa [#allocation4], 0
    %s13 = scalar_lea.sflag [#allocation4], 1
    %14 = vsyncpa %s13, 0
    %15 = vsyncpa [#allocation7], 0
    %16 = vsyncpa [#allocation5], 0
    loop: start=0, step=1, limit=4
    $region2: #{tpu_custom_call.1} parent=1 // loop_pre_header
      _
    $region3: #{tpu_custom_call.1} parent=1 // loop_header
      %s18 = sphi 0, %s22
      %p19 = scmp.ge.s32.totalorder %s18, 4
      %s28 = sphi 0, %s30
      %s31 = sphi 0, %s28
      %s32 = sphi 0, %s31
      %s48 = sphi 0, %s32
      %s52 = sphi 0, %s52
      %s54 = sphi 0, %s52
      %s55 = sphi 0, %s54
      %s69 = sphi 0, %s55
      %s73 = sphi 0, %s73
      %s75 = sphi 0, %s73
      %s76 = sphi 0, %s75
      %s90 = sphi 0, %s76
      %s94 = sphi 0, %s94
      %s96 = sphi 0, %s94
      %s97 = sphi 0, %s96
      %s111 = sphi 0, %s97
      %s115 = sphi 0, %s115
      %s117 = sphi 0, %s115
      %s118 = sphi 0, %s117
      %s132 = sphi 0, %s118
      %s136 = sphi 0, %s136
      %s138 = sphi 0, %s136
      %s139 = sphi 0, %s138
      %s153 = sphi 0, %s139
      %s157 = sphi 0, %s157
      %s159 = sphi 0, %s157
      %s160 = sphi 0, %s159
      %s174 = sphi 0, %s160
      %s178 = sphi 0, %s178
      %s180 = sphi 0, %s178
      %s181 = sphi 0, %s180
      %s195 = sphi 0, %s181
    $region4: #{tpu_custom_call.1} parent=1 // loop_header_branch
      %21 = sbr.rel (%p19) target = $region8
    $region5: #{tpu_custom_call.1} parent=1 // loop_body
      %s23 = ssub.s32 %s18, 1
      %s24 = ssub.s32 %s18, 2
      %s25 = sadd.s32 %s18, 1
      %s26 = ssub.s32 %s18, %s25
      %p27 = scmp.eq.s32.totalorder %s26, 0
      %s29 = sadd.s32 %s28, 1
      %s30 = scalar_select %p27, %s28, %s29
      %p33 = pneg %p27
      %p34 = scmp.eq.s32.totalorder %s18, 1
      %p35 = por %p33, %p34
      %p36 = scmp.ne.s32.totalorder %s28, %s31
      %p37 = scmp.eq.s32.totalorder %s18, 0
      %p38 = por %p36, %p37
      %p39 = scmp.ne.s32.totalorder %s28, %s31
      %p40 = scmp.eq.s32.totalorder %s23, 1
      %p41 = por %p39, %p40
      %p42 = scmp.ne.s32.totalorder %s31, %s32
      %p43 = scmp.eq.s32.totalorder %s23, 0
      %p44 = por %p42, %p43
      %p45 = scmp.ne.s32.totalorder %s31, %s32
      %p46 = scmp.eq.s32.totalorder %s24, 1
      %p47 = por %p45, %p46
      %p49 = scmp.ne.s32.totalorder %s32, %s48
      %p50 = scmp.eq.s32.totalorder %s24, 0
      %p51 = por %p49, %p50
      %s53 = sadd.s32 %s52, 1
      %p56 = scmp.eq.s32.totalorder %s18, 1
      %p57 = scmp.ne.s32.totalorder %s52, %s54
      %p58 = scmp.eq.s32.totalorder %s18, 0
      %p59 = por %p57, %p58
      %p60 = scmp.ne.s32.totalorder %s52, %s54
      %p61 = scmp.eq.s32.totalorder %s23, 1
      %p62 = por %p60, %p61
      %p63 = scmp.ne.s32.totalorder %s54, %s55
      %p64 = scmp.eq.s32.totalorder %s23, 0
      %p65 = por %p63, %p64
      %p66 = scmp.ne.s32.totalorder %s54, %s55
      %p67 = scmp.eq.s32.totalorder %s24, 1
      %p68 = por %p66, %p67
      %p70 = scmp.ne.s32.totalorder %s55, %s69
      %p71 = scmp.eq.s32.totalorder %s24, 0
      %p72 = por %p70, %p71
      %s74 = sadd.s32 %s73, 1
      %p77 = scmp.eq.s32.totalorder %s18, 1
      %p78 = scmp.ne.s32.totalorder %s73, %s75
      %p79 = scmp.eq.s32.totalorder %s18, 0
      %p80 = por %p78, %p79
      %p81 = scmp.ne.s32.totalorder %s73, %s75
      %p82 = scmp.eq.s32.totalorder %s23, 1
      %p83 = por %p81, %p82
      %p84 = scmp.ne.s32.totalorder %s75, %s76
      %p85 = scmp.eq.s32.totalorder %s23, 0
      %p86 = por %p84, %p85
      %p87 = scmp.ne.s32.totalorder %s75, %s76
      %p88 = scmp.eq.s32.totalorder %s24, 1
      %p89 = por %p87, %p88
      %p91 = scmp.ne.s32.totalorder %s76, %s90
      %p92 = scmp.eq.s32.totalorder %s24, 0
      %p93 = por %p91, %p92
      %s95 = sadd.s32 %s94, 1
      %p98 = scmp.eq.s32.totalorder %s18, 1
      %p99 = scmp.ne.s32.totalorder %s94, %s96
      %p100 = scmp.eq.s32.totalorder %s18, 0
      %p101 = por %p99, %p100
      %p102 = scmp.ne.s32.totalorder %s94, %s96
      %p103 = scmp.eq.s32.totalorder %s23, 1
      %p104 = por %p102, %p103
      %p105 = scmp.ne.s32.totalorder %s96, %s97
      %p106 = scmp.eq.s32.totalorder %s23, 0
      %p107 = por %p105, %p106
      %p108 = scmp.ne.s32.totalorder %s96, %s97
      %p109 = scmp.eq.s32.totalorder %s24, 1
      %p110 = por %p108, %p109
      %p112 = scmp.ne.s32.totalorder %s97, %s111
      %p113 = scmp.eq.s32.totalorder %s24, 0
      %p114 = por %p112, %p113
      %s116 = sadd.s32 %s115, 1
      %p119 = scmp.eq.s32.totalorder %s18, 1
      %p120 = scmp.ne.s32.totalorder %s115, %s117
      %p121 = scmp.eq.s32.totalorder %s18, 0
      %p122 = por %p120, %p121
      %p123 = scmp.ne.s32.totalorder %s115, %s117
      %p124 = scmp.eq.s32.totalorder %s23, 1
      %p125 = por %p123, %p124
      %p126 = scmp.ne.s32.totalorder %s117, %s118
      %p127 = scmp.eq.s32.totalorder %s23, 0
      %p128 = por %p126, %p127
      %p129 = scmp.ne.s32.totalorder %s117, %s118
      %p130 = scmp.eq.s32.totalorder %s24, 1
      %p131 = por %p129, %p130
      %p133 = scmp.ne.s32.totalorder %s118, %s132
      %p134 = scmp.eq.s32.totalorder %s24, 0
      %p135 = por %p133, %p134
      %s137 = sadd.s32 %s136, 1
      %p140 = scmp.eq.s32.totalorder %s18, 1
      %p141 = scmp.ne.s32.totalorder %s136, %s138
      %p142 = scmp.eq.s32.totalorder %s18, 0
      %p143 = por %p141, %p142
      %p144 = scmp.ne.s32.totalorder %s136, %s138
      %p145 = scmp.eq.s32.totalorder %s23, 1
      %p146 = por %p144, %p145
      %p147 = scmp.ne.s32.totalorder %s138, %s139
      %p148 = scmp.eq.s32.totalorder %s23, 0
      %p149 = por %p147, %p148
      %p150 = scmp.ne.s32.totalorder %s138, %s139
      %p151 = scmp.eq.s32.totalorder %s24, 1
      %p152 = por %p150, %p151
      %p154 = scmp.ne.s32.totalorder %s139, %s153
      %p155 = scmp.eq.s32.totalorder %s24, 0
      %p156 = por %p154, %p155
      %s158 = sadd.s32 %s157, 1
      %p161 = scmp.eq.s32.totalorder %s18, 1
      %p162 = scmp.ne.s32.totalorder %s157, %s159
      %p163 = scmp.eq.s32.totalorder %s18, 0
      %p164 = por %p162, %p163
      %p165 = scmp.ne.s32.totalorder %s157, %s159
      %p166 = scmp.eq.s32.totalorder %s23, 1
      %p167 = por %p165, %p166
      %p168 = scmp.ne.s32.totalorder %s159, %s160
      %p169 = scmp.eq.s32.totalorder %s23, 0
      %p170 = por %p168, %p169
      %p171 = scmp.ne.s32.totalorder %s159, %s160
      %p172 = scmp.eq.s32.totalorder %s24, 1
      %p173 = por %p171, %p172
      %p175 = scmp.ne.s32.totalorder %s160, %s174
      %p176 = scmp.eq.s32.totalorder %s24, 0
      %p177 = por %p175, %p176
      %s179 = sadd.s32 %s178, 1
      %p182 = scmp.eq.s32.totalorder %s18, 1
      %p183 = scmp.ne.s32.totalorder %s178, %s180
      %p184 = scmp.eq.s32.totalorder %s18, 0
      %p185 = por %p183, %p184
      %p186 = scmp.ne.s32.totalorder %s178, %s180
      %p187 = scmp.eq.s32.totalorder %s23, 1
      %p188 = por %p186, %p187
      %p189 = scmp.ne.s32.totalorder %s180, %s181
      %p190 = scmp.eq.s32.totalorder %s23, 0
      %p191 = por %p189, %p190
      %p192 = scmp.ne.s32.totalorder %s180, %s181
      %p193 = scmp.eq.s32.totalorder %s24, 1
      %p194 = por %p192, %p193
      %p196 = scmp.ne.s32.totalorder %s181, %s195
      %p197 = scmp.eq.s32.totalorder %s24, 0
      %p198 = por %p196, %p197
      %p199 = scmp.le.s32.totalorder 1, %s18
      %p200 = scmp.lt.s32.totalorder %s18, 3
      %p201 = pnand %p199, %p200
      %p202 = pneg %p201
      // Predicated region
      $region9: #{tpu_custom_call.1} parent=5 // pred_check
        _
      $region10: #{tpu_custom_call.1} parent=5 // pred_check_branch
        %204 = sbr.rel (%p201) target = $region12
      $region11: #{tpu_custom_call.1} parent=5 // pred_region
        %s205 = ssub.s32 %s18, 1
        // Predicated region
        $region13: #{tpu_custom_call.1} parent=11 // pred_check
          %p206 = pneg %p65
        $region14: #{tpu_custom_call.1} parent=11 // pred_check_branch
          %208 = sbr.rel (%p206) target = $region16
        $region15: #{tpu_custom_call.1} parent=11 // pred_region
          %s210 = ssub.s32 128, 128
          %211 = vsyncadd [#allocation7], %s210
          %s213 = sshll.u32 [#allocation6], 4
          %s214 = int_to_ptr.vmem [resolvable:$true] %s213
          %216 = dma.hbm_to_vmem [thread:$0]  %s1, 128, %s214, [#allocation7]
        $region16: #{tpu_custom_call.1} parent=11 // pred_fallthru
          _
        // Predicated region
        $region17: #{tpu_custom_call.1} parent=11 // pred_check
          %p217 = pneg %p86
        $region18: #{tpu_custom_call.1} parent=11 // pred_check_branch
          %219 = sbr.rel (%p217) target = $region20
        $region19: #{tpu_custom_call.1} parent=11 // pred_region
          _
        $region20: #{tpu_custom_call.1} parent=11 // pred_fallthru
          _
        // Predicated region
        $region21: #{tpu_custom_call.1} parent=11 // pred_check
          %p220 = pneg %p107
        $region22: #{tpu_custom_call.1} parent=11 // pred_check_branch
          %222 = sbr.rel (%p220) target = $region24
        $region23: #{tpu_custom_call.1} parent=11 // pred_region
          _
        $region24: #{tpu_custom_call.1} parent=11 // pred_fallthru
          _
        // Predicated region
        $region25: #{tpu_custom_call.1} parent=11 // pred_check
          %p223 = pneg %p128
        $region26: #{tpu_custom_call.1} parent=11 // pred_check_branch
          %225 = sbr.rel (%p223) target = $region28
        $region27: #{tpu_custom_call.1} parent=11 // pred_region
          _
        $region28: #{tpu_custom_call.1} parent=11 // pred_fallthru
          _
        // Predicated region
        $region29: #{tpu_custom_call.1} parent=11 // pred_check
          %p226 = pneg %p149
        $region30: #{tpu_custom_call.1} parent=11 // pred_check_branch
          %228 = sbr.rel (%p226) target = $region32
        $region31: #{tpu_custom_call.1} parent=11 // pred_region
          %s230 = ssub.s32 2048, 2048
          %231 = vsyncadd [#allocation7], %s230
          %s232 = sshll.u32 [#allocation8], 4
          %s233 = int_to_ptr.vmem [resolvable:$true] %s232
          %238 = dma.hbm_to_vmem [thread:$0]  %s5, 2048, %s233, [#allocation7], 64, 64, 4
        $region32: #{tpu_custom_call.1} parent=11 // pred_fallthru
          _
        // Predicated region
        $region33: #{tpu_custom_call.1} parent=11 // pred_check
          %p239 = pneg %p170
        $region34: #{tpu_custom_call.1} parent=11 // pred_check_branch
          %241 = sbr.rel (%p239) target = $region36
        $region35: #{tpu_custom_call.1} parent=11 // pred_region
          _
        $region36: #{tpu_custom_call.1} parent=11 // pred_fallthru
          _
      $region12: #{tpu_custom_call.1} parent=5 // pred_fallthru
        _
      %p242 = scmp.lt.s32.totalorder %s18, 2
      // Predicated region
      $region37: #{tpu_custom_call.1} parent=5 // pred_check
        %p243 = pneg %p242
      $region38: #{tpu_custom_call.1} parent=5 // pred_check_branch
        %245 = sbr.rel (%p243) target = $region40
      $region39: #{tpu_custom_call.1} parent=5 // pred_region
        // Predicated region
        $region41: #{tpu_custom_call.1} parent=39 // pred_check
          %p246 = pneg %p38
        $region42: #{tpu_custom_call.1} parent=39 // pred_check_branch
          %248 = sbr.rel (%p246) target = $region44
        $region43: #{tpu_custom_call.1} parent=39 // pred_region
          %s249 = sand.u32 %s28, 1
          %s250 = scalar_lea.sflag [#allocation4], %s249
          %s251 = sand.u32 %s28, 1
          %s252 = smul.addr %s251, 4
          %s253 = scalar_lea.vmem [#allocation3], %s252
          %s255 = ssub.s32 64, 64
          %256 = vsyncadd %s250, %s255
          %s257 = smul.addr %s18, 64
          %s258 = scalar_lea.hbm %s0, %s257
          %s260 = sshll.u32 %s253, 4
          %s261 = int_to_ptr.vmem [resolvable:$true] %s260
          %263 = dma.hbm_to_vmem [thread:$0]  %s258, 64, %s261, %s250
        $region44: #{tpu_custom_call.1} parent=39 // pred_fallthru
          _
      $region40: #{tpu_custom_call.1} parent=5 // pred_fallthru
        _
      %p264 = scmp.le.s32.totalorder 1, %s18
      %p265 = scmp.lt.s32.totalorder %s18, 3
      %p266 = pnand %p264, %p265
      %p267 = pneg %p266
      // Predicated region
      $region45: #{tpu_custom_call.1} parent=5 // pred_check
        _
      $region46: #{tpu_custom_call.1} parent=5 // pred_check_branch
        %269 = sbr.rel (%p266) target = $region48
      $region47: #{tpu_custom_call.1} parent=5 // pred_region
        %s270 = ssub.s32 %s18, 1
        %s271 = sand.u32 %s31, 1
        %s272 = scalar_lea.sflag [#allocation4], %s271
        %s273 = sand.u32 %s31, 1
        %s274 = smul.addr %s273, 4
        %s275 = scalar_lea.vmem [#allocation3], %s274
        // Predicated region
        $region49: #{tpu_custom_call.1} parent=47 // pred_check
          %p276 = pneg %p44
        $region50: #{tpu_custom_call.1} parent=47 // pred_check_branch
          %278 = sbr.rel (%p276) target = $region52
        $region51: #{tpu_custom_call.1} parent=47 // pred_region
          %279 = dma.done %s272, 64
        $region52: #{tpu_custom_call.1} parent=47 // pred_fallthru
          _
        // Predicated region
        $region53: #{tpu_custom_call.1} parent=47 // pred_check
          %p280 = pneg %p65
        $region54: #{tpu_custom_call.1} parent=47 // pred_check_branch
          %282 = sbr.rel (%p280) target = $region56
        $region55: #{tpu_custom_call.1} parent=47 // pred_region
          %283 = dma.done [#allocation7], 128
        $region56: #{tpu_custom_call.1} parent=47 // pred_fallthru
          _
        // Predicated region
        $region57: #{tpu_custom_call.1} parent=47 // pred_check
          %p284 = pneg %p149
        $region58: #{tpu_custom_call.1} parent=47 // pred_check_branch
          %286 = sbr.rel (%p284) target = $region60
        $region59: #{tpu_custom_call.1} parent=47 // pred_region
          %287 = dma.done [#allocation7], 2048
        $region60: #{tpu_custom_call.1} parent=47 // pred_fallthru
          _
        %s288 = sand.u32 %s31, 1
        %s289 = scalar_lea.sflag [#allocation4], %s288
        %s290 = sand.u32 %s31, 1
        %s291 = smul.addr %s290, 4
        %s292 = scalar_lea.vmem [#allocation3], %s291
        %p293 = pneg %p44
        %p294 = pneg %p41
        %p295 = pneg %p65
        %p296 = pneg %p62
        %p297 = pneg %p86
        %p298 = pneg %p83
        %p299 = pneg %p107
        %p300 = pneg %p104
        %p301 = pneg %p128
        %p302 = pneg %p125
        %p303 = pneg %p149
        %p304 = pneg %p146
        %p305 = pneg %p170
        %p306 = pneg %p167
        %p307 = pneg %p191
        %p308 = pneg %p188
        %p310 = scmp.eq.s32.totalorder %s23, 0
        // Predicated region
        $region61: #{tpu_custom_call.1} parent=47 // pred_check
          %p311 = pneg %p310
        $region62: #{tpu_custom_call.1} parent=47 // pred_check_branch
          %313 = sbr.rel (%p311) target = $region64
        $region63: #{tpu_custom_call.1} parent=47 // pred_region
          %314 = vst [vmem:[#allocation2] sm:$0xf] 0.0
        $region64: #{tpu_custom_call.1} parent=47 // pred_fallthru
          _
        %v315 = vld [vmem:[%s275] sm:$0xf]
        %v316 = vunpack.c.l.bf16 %v315
        %317 = vxpose.xlu0.b32.start [1/16] %v316, 128
        %318 = vxpose.xlu0.b32.cont [2/16] 0.0, 128
        %319 = vxpose.xlu0.b32.cont [3/16] 0.0, 128
        %320 = vxpose.xlu0.b32.cont [4/16] 0.0, 128
        %321 = vxpose.xlu0.b32.cont [5/16] 0.0, 128
        %322 = vxpose.xlu0.b32.cont [6/16] 0.0, 128
        %323 = vxpose.xlu0.b32.cont [7/16] 0.0, 128
        %324 = vxpose.xlu0.b32.cont [8/16] 0.0, 128
        %325 = vxpose.xlu0.b32.cont [9/16] 0.0, 128
        %326 = vxpose.xlu0.b32.cont [10/16] 0.0, 128
        %327 = vxpose.xlu0.b32.cont [11/16] 0.0, 128
        %328 = vxpose.xlu0.b32.cont [12/16] 0.0, 128
        %329 = vxpose.xlu0.b32.cont [13/16] 0.0, 128
        %330 = vxpose.xlu0.b32.cont [14/16] 0.0, 128
        %331 = vxpose.xlu0.b32.cont [15/16] 0.0, 128
        %332 = vxpose.xlu0.b32.end [16/16] 0.0, 128
        %v333 = vpop.trf.xlu0
        %v334 = vpop.trf.xlu0
        %v335 = vpop.trf.xlu0
        %v336 = vpop.trf.xlu0
        %v337 = vpop.trf.xlu0
        %v338 = vpop.trf.xlu0
        %v339 = vpop.trf.xlu0
        %v340 = vpop.trf.xlu0
        %v341 = vpop.trf.xlu0
        %v342 = vpop.trf.xlu0
        %v343 = vpop.trf.xlu0
        %v344 = vpop.trf.xlu0
        %v345 = vpop.trf.xlu0
        %v346 = vpop.trf.xlu0
        %v347 = vpop.trf.xlu0
        %v348 = vpop.trf.xlu0
        %v349 = vld [vmem:[#allocation6] sm:$0xff]
        %v350 = vld [vmem:[%s2] sm:$0x3]
        %v352 = vlaneseq
        %v353 = vshrl.u32 %v352, 7
        %v354 = vsub.s32 0, %v353
        %v355 = vrot.slane %v350, %v354
        %v356 = vlaneseq
        %v357 = vshrl.u32 %v356, 7
        %v358 = vsub.s32 1, %v357
        %v359 = vrot.slane %v350, %v358
        %v363 = vcombine.high %v349, %v349
        %vm364 = vcmask 31744
        %v366 = vsel %vm364, %v333, 0
        %v369 = vsel %vm364, %v334, 0
        %v372 = vsel %vm364, %v335, 0
        %v375 = vsel %vm364, %v336, 0
        %v378 = vsel %vm364, %v337, 0
        %v381 = vsel %vm364, %v338, 0
        %v384 = vsel %vm364, %v339, 0
        %v387 = vsel %vm364, %v340, 0
        %v390 = vsel %vm364, %v341, 0
        %v393 = vsel %vm364, %v342, 0
        %v396 = vsel %vm364, %v343, 0
        %v399 = vsel %vm364, %v344, 0
        %v402 = vsel %vm364, %v345, 0
        %v405 = vsel %vm364, %v346, 0
        %v408 = vsel %vm364, %v347, 0
        %v411 = vsel %vm364, %v348, 0
        %vm413 = vcmask 1043456
        %v414 = vsel %vm413, %v349, 0
        %v416 = vsel %vm413, %v363, 0
        %418 = vmatprep.subr.mxu0 0.0
        %419 = vmatpush1.msra.mxu0 0.0
        %420 = vmatprep.subr.mxu0 0.0
        %421 = vmatpush1.msra.mxu0 0.0
        %422 = vmatprep.subr.mxu0 0.0
        %423 = vmatpush1.msra.mxu0 0.0
        %424 = vmatprep.subr.mxu0 0.0
        %425 = vmatpush1.msra.mxu0 0.0
        %426 = vmatprep.subr.mxu0 0.0
        %427 = vmatpush1.msra.mxu0 0.0
        %428 = vmatprep.subr.mxu0 0.0
        %429 = vmatpush1.msra.mxu0 0.0
        %430 = vmatprep.subr.mxu0 0.0
        %431 = vmatpush1.msra.mxu0 0.0
        %432 = vmatprep.subr.mxu0 0.0
        %433 = vmatpush1.msra.mxu0 0.0
        %434 = vmatprep.subr.mxu0 0.0
        %435 = vmatpush1.msra.mxu0 0.0
        %436 = vmatprep.subr.mxu0 0.0
        %437 = vmatpush1.msra.mxu0 0.0
        %438 = vmatprep.subr.mxu0 0.0
        %439 = vmatpush1.msra.mxu0 0.0
        %440 = vmatprep.subr.mxu0 0.0
        %441 = vmatpush1.msra.mxu0 0.0
        %442 = vmatprep.subr.mxu0 0.0
        %443 = vmatpush1.msra.mxu0 0.0
        %444 = vmatprep.subr.mxu0 0.0
        %445 = vmatpush1.msra.mxu0 0.0
        %446 = vmatprep.subr.mxu0 0.0
        %447 = vmatpush1.msra.mxu0 0.0
        %448 = vmatprep.subr.mxu0 %v416
        %449 = vmatpush1.msra.mxu0 %v414
        %450 = vmatprep.subr.mxu0 0.0
        %451 = vmatpush2.msra.mxu0 0.0
        %452 = vmatprep.subr.mxu0 0.0
        %453 = vmatpush2.msra.mxu0 0.0
        %454 = vmatprep.subr.mxu0 0.0
        %455 = vmatpush2.msra.mxu0 0.0
        %456 = vmatprep.subr.mxu0 0.0
        %457 = vmatpush2.msra.mxu0 0.0
        %458 = vmatprep.subr.mxu0 0.0
        %459 = vmatpush2.msra.mxu0 0.0
        %460 = vmatprep.subr.mxu0 0.0
        %461 = vmatpush2.msra.mxu0 0.0
        %462 = vmatprep.subr.mxu0 0.0
        %463 = vmatpush2.msra.mxu0 0.0
        %464 = vmatprep.subr.mxu0 0.0
        %465 = vmatpush2.msra.mxu0 0.0
        %466 = vmatprep.subr.mxu0 0.0
        %467 = vmatpush2.msra.mxu0 0.0
        %468 = vmatprep.subr.mxu0 0.0
        %469 = vmatpush2.msra.mxu0 0.0
        %470 = vmatprep.subr.mxu0 0.0
        %471 = vmatpush2.msra.mxu0 0.0
        %472 = vmatprep.subr.mxu0 0.0
        %473 = vmatpush2.msra.mxu0 0.0
        %474 = vmatprep.subr.mxu0 0.0
        %475 = vmatpush2.msra.mxu0 0.0
        %476 = vmatprep.subr.mxu0 0.0
        %477 = vmatpush2.msra.mxu0 0.0
        %478 = vmatprep.subr.mxu0 0.0
        %479 = vmatpush2.msra.mxu0 0.0
        %480 = vmatprep.subr.mxu0 0.0
        %481 = vmatpush2.msra.mxu0 0.0
        %482 = vmatprep.mubr.f32.mxu0 0.0
        %483 = vmatmul.mubr.f32.gmra.mxu0 %v366
        %v484 = vpop.f32.mrf.mxu0
        %v485 = vadd.f32 %v355, %v484
        %v486 = vpop.f32.mrf.mxu0
        %v487 = vadd.f32 %v359, %v486
        %488 = vmatprep.mubr.f32.mxu0 0.0
        %489 = vmatmul.mubr.f32.gmra.mxu0 %v369
        %v490 = vpop.f32.mrf.mxu0
        %v491 = vadd.f32 %v355, %v490
        %v492 = vpop.f32.mrf.mxu0
        %v493 = vadd.f32 %v359, %v492
        %494 = vmatprep.mubr.f32.mxu0 0.0
        %495 = vmatmul.mubr.f32.gmra.mxu0 %v372
        %v496 = vpop.f32.mrf.mxu0
        %v497 = vadd.f32 %v355, %v496
        %v498 = vpop.f32.mrf.mxu0
        %v499 = vadd.f32 %v359, %v498
        %500 = vmatprep.mubr.f32.mxu0 0.0
        %501 = vmatmul.mubr.f32.gmra.mxu0 %v375
        %v502 = vpop.f32.mrf.mxu0
        %v503 = vadd.f32 %v355, %v502
        %v504 = vpop.f32.mrf.mxu0
        %v505 = vadd.f32 %v359, %v504
        %506 = vmatprep.mubr.f32.mxu0 0.0
        %507 = vmatmul.mubr.f32.gmra.mxu0 %v378
        %v508 = vpop.f32.mrf.mxu0
        %v509 = vadd.f32 %v355, %v508
        %v510 = vpop.f32.mrf.mxu0
        %v511 = vadd.f32 %v359, %v510
        %512 = vmatprep.mubr.f32.mxu0 0.0
        %513 = vmatmul.mubr.f32.gmra.mxu0 %v381
        %v514 = vpop.f32.mrf.mxu0
        %v515 = vadd.f32 %v355, %v514
        %v516 = vpop.f32.mrf.mxu0
        %v517 = vadd.f32 %v359, %v516
        %518 = vmatprep.mubr.f32.mxu0 0.0
        %519 = vmatmul.mubr.f32.gmra.mxu0 %v384
        %v520 = vpop.f32.mrf.mxu0
        %v521 = vadd.f32 %v355, %v520
        %v522 = vpop.f32.mrf.mxu0
        %v523 = vadd.f32 %v359, %v522
        %524 = vmatprep.mubr.f32.mxu0 0.0
        %525 = vmatmul.mubr.f32.gmra.mxu0 %v387
        %v526 = vpop.f32.mrf.mxu0
        %v527 = vadd.f32 %v355, %v526
        %v528 = vpop.f32.mrf.mxu0
        %v529 = vadd.f32 %v359, %v528
        %530 = vmatprep.mubr.f32.mxu0 0.0
        %531 = vmatmul.mubr.f32.gmra.mxu0 %v390
        %v532 = vpop.f32.mrf.mxu0
        %v533 = vadd.f32 %v355, %v532
        %v534 = vpop.f32.mrf.mxu0
        %v535 = vadd.f32 %v359, %v534
        %536 = vmatprep.mubr.f32.mxu0 0.0
        %537 = vmatmul.mubr.f32.gmra.mxu0 %v393
        %v538 = vpop.f32.mrf.mxu0
        %v539 = vadd.f32 %v355, %v538
        %v540 = vpop.f32.mrf.mxu0
        %v541 = vadd.f32 %v359, %v540
        %542 = vmatprep.mubr.f32.mxu0 0.0
        %543 = vmatmul.mubr.f32.gmra.mxu0 %v396
        %v544 = vpop.f32.mrf.mxu0
        %v545 = vadd.f32 %v355, %v544
        %v546 = vpop.f32.mrf.mxu0
        %v547 = vadd.f32 %v359, %v546
        %548 = vmatprep.mubr.f32.mxu0 0.0
        %549 = vmatmul.mubr.f32.gmra.mxu0 %v399
        %v550 = vpop.f32.mrf.mxu0
        %v551 = vadd.f32 %v355, %v550
        %v552 = vpop.f32.mrf.mxu0
        %v553 = vadd.f32 %v359, %v552
        %554 = vmatprep.mubr.f32.mxu0 0.0
        %555 = vmatmul.mubr.f32.gmra.mxu0 %v402
        %v556 = vpop.f32.mrf.mxu0
        %v557 = vadd.f32 %v355, %v556
        %v558 = vpop.f32.mrf.mxu0
        %v559 = vadd.f32 %v359, %v558
        %560 = vmatprep.mubr.f32.mxu0 0.0
        %561 = vmatmul.mubr.f32.gmra.mxu0 %v405
        %v562 = vpop.f32.mrf.mxu0
        %v563 = vadd.f32 %v355, %v562
        %v564 = vpop.f32.mrf.mxu0
        %v565 = vadd.f32 %v359, %v564
        %566 = vmatprep.mubr.f32.mxu0 0.0
        %567 = vmatmul.mubr.f32.gmra.mxu0 %v408
        %v568 = vpop.f32.mrf.mxu0
        %v569 = vadd.f32 %v355, %v568
        %v570 = vpop.f32.mrf.mxu0
        %v571 = vadd.f32 %v359, %v570
        %572 = vmatprep.mubr.f32.mxu0 0.0
        %573 = vmatmul.mubr.f32.gmra.mxu0 %v411
        %v574 = vpop.f32.mrf.mxu0
        %v575 = vadd.f32 %v355, %v574
        %v576 = vpop.f32.mrf.mxu0
        %v577 = vadd.f32 %v359, %v576
        %578 = vdwg.mxu0
        %v579 = vmax.f32 %v485, 0.0
        %v580 = vmax.f32 %v487, 0.0
        %v581 = vmax.f32 %v491, 0.0
        %v582 = vmax.f32 %v493, 0.0
        %v583 = vmax.f32 %v497, 0.0
        %v584 = vmax.f32 %v499, 0.0
        %v585 = vmax.f32 %v503, 0.0
        %v586 = vmax.f32 %v505, 0.0
        %v587 = vmax.f32 %v509, 0.0
        %v588 = vmax.f32 %v511, 0.0
        %v589 = vmax.f32 %v515, 0.0
        %v590 = vmax.f32 %v517, 0.0
        %v591 = vmax.f32 %v521, 0.0
        %v592 = vmax.f32 %v523, 0.0
        %v593 = vmax.f32 %v527, 0.0
        %v594 = vmax.f32 %v529, 0.0
        %v595 = vmax.f32 %v533, 0.0
        %v596 = vmax.f32 %v535, 0.0
        %v597 = vmax.f32 %v539, 0.0
        %v598 = vmax.f32 %v541, 0.0
        %v599 = vmax.f32 %v545, 0.0
        %v600 = vmax.f32 %v547, 0.0
        %v601 = vmax.f32 %v551, 0.0
        %v602 = vmax.f32 %v553, 0.0
        %v603 = vmax.f32 %v557, 0.0
        %v604 = vmax.f32 %v559, 0.0
        %v605 = vmax.f32 %v563, 0.0
        %v606 = vmax.f32 %v565, 0.0
        %v607 = vmax.f32 %v569, 0.0
        %v608 = vmax.f32 %v571, 0.0
        %v609 = vmax.f32 %v575, 0.0
        %v610 = vmax.f32 %v577, 0.0
        %v611 = vld [vmem:[#allocation2] ss:$2 sm:$0x3]
        %v612 = vadd.f32 %v579, %v581
        %v613 = vadd.f32 %v612, %v583
        %v614 = vadd.f32 %v613, %v585
        %v615 = vadd.f32 %v614, %v587
        %v616 = vadd.f32 %v615, %v589
        %v617 = vadd.f32 %v616, %v591
        %v618 = vadd.f32 %v617, %v593
        %v619 = vadd.f32 %v618, %v595
        %v620 = vadd.f32 %v619, %v597
        %v621 = vadd.f32 %v620, %v599
        %v622 = vadd.f32 %v621, %v601
        %v623 = vadd.f32 %v622, %v603
        %v624 = vadd.f32 %v623, %v605
        %v625 = vadd.f32 %v624, %v607
        %v626 = vadd.f32 %v625, %v609
        %v627 = vrot.slane %v626, 4
        %v628 = vadd.f32 %v626, %v627
        %v629 = vrot.slane %v628, 2
        %v630 = vadd.f32 %v628, %v629
        %v631 = vrot.slane %v630, 1
        %v632 = vadd.f32 %v630, %v631
        %v633 = vadd.f32 %v580, %v582
        %v634 = vadd.f32 %v633, %v584
        %v635 = vadd.f32 %v634, %v586
        %v636 = vadd.f32 %v635, %v588
        %v637 = vadd.f32 %v636, %v590
        %v638 = vadd.f32 %v637, %v592
        %v639 = vadd.f32 %v638, %v594
        %v640 = vadd.f32 %v639, %v596
        %v641 = vadd.f32 %v640, %v598
        %v642 = vadd.f32 %v641, %v600
        %v643 = vadd.f32 %v642, %v602
        %v644 = vadd.f32 %v643, %v604
        %v645 = vadd.f32 %v644, %v606
        %v646 = vadd.f32 %v645, %v608
        %v647 = vadd.f32 %v646, %v610
        %v648 = vrot.slane %v647, 4
        %v649 = vadd.f32 %v647, %v648
        %v650 = vrot.slane %v649, 2
        %v651 = vadd.f32 %v649, %v650
        %v652 = vrot.slane %v651, 1
        %v653 = vadd.f32 %v651, %v652
        %v656 = vcombine.low %v632, %v653
        %v658 = vunpack.c.l.s4 1966171168
        %v659 = vunpack.c.0.s8 %v658
        %v660 = vlaneseq
        %v661 = vshrl.u32 %v660, 7
        %v662 = vsub.s32 %v659, %v661
        %v663 = vrot.slane %v656, %v662
        %v665 = vunpack.c.l.s4 1966171168
        %v666 = vunpack.c.0.s8 %v665
        %v667 = vlaneseq
        %v668 = vshrl.u32 %v667, 7
        %v669 = vsub.s32 %v666, %v668
        %v670 = vrot.slane %v663, %v669
        %v672 = vadd.f32 %v611, %v670
        %v673 = vlaneseq
        %vm674 = vcmp.ge.s32.totalorder %v673, 0
        %vm675 = vcmp.lt.s32.totalorder %v673, 256
        %vm676 = vmand %vm674, %vm675
        %677 = vst.msk [vmem:[#allocation2] ss:$2 sm:$0x3] %vm676, %v672
        %v678 = vld [vmem:[#allocation6] sm:$0xff]
        %v679 = vld [vmem:[%s2] sm:$0x3]
        %v681 = vlaneseq
        %v682 = vshrl.u32 %v681, 7
        %v683 = vsub.s32 0, %v682
        %v684 = vrot.slane %v679, %v683
        %v685 = vlaneseq
        %v686 = vshrl.u32 %v685, 7
        %v687 = vsub.s32 1, %v686
        %v688 = vrot.slane %v679, %v687
        %691 = vrot.lane.b32.xlu0 %v333, 124
        %v692 = vpop.permute.xlu0 %691
        %693 = vrot.lane.b32.xlu0 %v334, 124
        %v694 = vpop.permute.xlu0 %693
        %695 = vrot.lane.b32.xlu0 %v335, 124
        %v696 = vpop.permute.xlu0 %695
        %697 = vrot.lane.b32.xlu0 %v336, 124
        %v698 = vpop.permute.xlu0 %697
        %699 = vrot.lane.b32.xlu0 %v337, 124
        %v700 = vpop.permute.xlu0 %699
        %701 = vrot.lane.b32.xlu0 %v338, 124
        %v702 = vpop.permute.xlu0 %701
        %703 = vrot.lane.b32.xlu0 %v339, 124
        %v704 = vpop.permute.xlu0 %703
        %705 = vrot.lane.b32.xlu0 %v340, 124
        %v706 = vpop.permute.xlu0 %705
        %707 = vrot.lane.b32.xlu0 %v341, 124
        %v708 = vpop.permute.xlu0 %707
        %709 = vrot.lane.b32.xlu0 %v342, 124
        %v710 = vpop.permute.xlu0 %709
        %711 = vrot.lane.b32.xlu0 %v343, 124
        %v712 = vpop.permute.xlu0 %711
        %713 = vrot.lane.b32.xlu0 %v344, 124
        %v714 = vpop.permute.xlu0 %713
        %715 = vrot.lane.b32.xlu0 %v345, 124
        %v716 = vpop.permute.xlu0 %715
        %717 = vrot.lane.b32.xlu0 %v346, 124
        %v718 = vpop.permute.xlu0 %717
        %719 = vrot.lane.b32.xlu0 %v347, 124
        %v720 = vpop.permute.xlu0 %719
        %721 = vrot.lane.b32.xlu0 %v348, 124
        %v722 = vpop.permute.xlu0 %721
        %v724 = vcombine.high %v678, %v678
        %v725 = vsel %vm364, %v692, 0
        %v727 = vsel %vm364, %v694, 0
        %v729 = vsel %vm364, %v696, 0
        %v731 = vsel %vm364, %v698, 0
        %v733 = vsel %vm364, %v700, 0
        %v735 = vsel %vm364, %v702, 0
        %v737 = vsel %vm364, %v704, 0
        %v739 = vsel %vm364, %v706, 0
        %v741 = vsel %vm364, %v708, 0
        %v743 = vsel %vm364, %v710, 0
        %v745 = vsel %vm364, %v712, 0
        %v747 = vsel %vm364, %v714, 0
        %v749 = vsel %vm364, %v716, 0
        %v751 = vsel %vm364, %v718, 0
        %v753 = vsel %vm364, %v720, 0
        %v755 = vsel %vm364, %v722, 0
        %v757 = vsel %vm413, %v678, 0
        %v759 = vsel %vm413, %v724, 0
        %761 = vmatprep.subr.mxu0 0.0
        %762 = vmatpush1.msra.mxu0 0.0
        %763 = vmatprep.subr.mxu0 0.0
        %764 = vmatpush1.msra.mxu0 0.0
        %765 = vmatprep.subr.mxu0 0.0
        %766 = vmatpush1.msra.mxu0 0.0
        %767 = vmatprep.subr.mxu0 0.0
        %768 = vmatpush1.msra.mxu0 0.0
        %769 = vmatprep.subr.mxu0 0.0
        %770 = vmatpush1.msra.mxu0 0.0
        %771 = vmatprep.subr.mxu0 0.0
        %772 = vmatpush1.msra.mxu0 0.0
        %773 = vmatprep.subr.mxu0 0.0
        %774 = vmatpush1.msra.mxu0 0.0
        %775 = vmatprep.subr.mxu0 0.0
        %776 = vmatpush1.msra.mxu0 0.0
        %777 = vmatprep.subr.mxu0 0.0
        %778 = vmatpush1.msra.mxu0 0.0
        %779 = vmatprep.subr.mxu0 0.0
        %780 = vmatpush1.msra.mxu0 0.0
        %781 = vmatprep.subr.mxu0 0.0
        %782 = vmatpush1.msra.mxu0 0.0
        %783 = vmatprep.subr.mxu0 0.0
        %784 = vmatpush1.msra.mxu0 0.0
        %785 = vmatprep.subr.mxu0 0.0
        %786 = vmatpush1.msra.mxu0 0.0
        %787 = vmatprep.subr.mxu0 0.0
        %788 = vmatpush1.msra.mxu0 0.0
        %789 = vmatprep.subr.mxu0 0.0
        %790 = vmatpush1.msra.mxu0 0.0
        %791 = vmatprep.subr.mxu0 %v759
        %792 = vmatpush1.msra.mxu0 %v757
        %793 = vmatprep.subr.mxu0 0.0
        %794 = vmatpush2.msra.mxu0 0.0
        %795 = vmatprep.subr.mxu0 0.0
        %796 = vmatpush2.msra.mxu0 0.0
        %797 = vmatprep.subr.mxu0 0.0
        %798 = vmatpush2.msra.mxu0 0.0
        %799 = vmatprep.subr.mxu0 0.0
        %800 = vmatpush2.msra.mxu0 0.0
        %801 = vmatprep.subr.mxu0 0.0
        %802 = vmatpush2.msra.mxu0 0.0
        %803 = vmatprep.subr.mxu0 0.0
        %804 = vmatpush2.msra.mxu0 0.0
        %805 = vmatprep.subr.mxu0 0.0
        %806 = vmatpush2.msra.mxu0 0.0
        %807 = vmatprep.subr.mxu0 0.0
        %808 = vmatpush2.msra.mxu0 0.0
        %809 = vmatprep.subr.mxu0 0.0
        %810 = vmatpush2.msra.mxu0 0.0
        %811 = vmatprep.subr.mxu0 0.0
        %812 = vmatpush2.msra.mxu0 0.0
        %813 = vmatprep.subr.mxu0 0.0
        %814 = vmatpush2.msra.mxu0 0.0
        %815 = vmatprep.subr.mxu0 0.0
        %816 = vmatpush2.msra.mxu0 0.0
        %817 = vmatprep.subr.mxu0 0.0
        %818 = vmatpush2.msra.mxu0 0.0
        %819 = vmatprep.subr.mxu0 0.0
        %820 = vmatpush2.msra.mxu0 0.0
        %821 = vmatprep.subr.mxu0 0.0
        %822 = vmatpush2.msra.mxu0 0.0
        %823 = vmatprep.subr.mxu0 0.0
        %824 = vmatpush2.msra.mxu0 0.0
        %825 = vmatprep.mubr.f32.mxu0 0.0
        %826 = vmatmul.mubr.f32.gmra.mxu0 %v725
        %v827 = vpop.f32.mrf.mxu0
        %v828 = vadd.f32 %v684, %v827
        %v829 = vpop.f32.mrf.mxu0
        %v830 = vadd.f32 %v688, %v829
        %831 = vmatprep.mubr.f32.mxu0 0.0
        %832 = vmatmul.mubr.f32.gmra.mxu0 %v727
        %v833 = vpop.f32.mrf.mxu0
        %v834 = vadd.f32 %v684, %v833
        %v835 = vpop.f32.mrf.mxu0
        %v836 = vadd.f32 %v688, %v835
        %837 = vmatprep.mubr.f32.mxu0 0.0
        %838 = vmatmul.mubr.f32.gmra.mxu0 %v729
        %v839 = vpop.f32.mrf.mxu0
        %v840 = vadd.f32 %v684, %v839
        %v841 = vpop.f32.mrf.mxu0
        %v842 = vadd.f32 %v688, %v841
        %843 = vmatprep.mubr.f32.mxu0 0.0
        %844 = vmatmul.mubr.f32.gmra.mxu0 %v731
        %v845 = vpop.f32.mrf.mxu0
        %v846 = vadd.f32 %v684, %v845
        %v847 = vpop.f32.mrf.mxu0
        %v848 = vadd.f32 %v688, %v847
        %849 = vmatprep.mubr.f32.mxu0 0.0
        %850 = vmatmul.mubr.f32.gmra.mxu0 %v733
        %v851 = vpop.f32.mrf.mxu0
        %v852 = vadd.f32 %v684, %v851
        %v853 = vpop.f32.mrf.mxu0
        %v854 = vadd.f32 %v688, %v853
        %855 = vmatprep.mubr.f32.mxu0 0.0
        %856 = vmatmul.mubr.f32.gmra.mxu0 %v735
        %v857 = vpop.f32.mrf.mxu0
        %v858 = vadd.f32 %v684, %v857
        %v859 = vpop.f32.mrf.mxu0
        %v860 = vadd.f32 %v688, %v859
        %861 = vmatprep.mubr.f32.mxu0 0.0
        %862 = vmatmul.mubr.f32.gmra.mxu0 %v737
        %v863 = vpop.f32.mrf.mxu0
        %v864 = vadd.f32 %v684, %v863
        %v865 = vpop.f32.mrf.mxu0
        %v866 = vadd.f32 %v688, %v865
        %867 = vmatprep.mubr.f32.mxu0 0.0
        %868 = vmatmul.mubr.f32.gmra.mxu0 %v739
        %v869 = vpop.f32.mrf.mxu0
        %v870 = vadd.f32 %v684, %v869
        %v871 = vpop.f32.mrf.mxu0
        %v872 = vadd.f32 %v688, %v871
        %873 = vmatprep.mubr.f32.mxu0 0.0
        %874 = vmatmul.mubr.f32.gmra.mxu0 %v741
        %v875 = vpop.f32.mrf.mxu0
        %v876 = vadd.f32 %v684, %v875
        %v877 = vpop.f32.mrf.mxu0
        %v878 = vadd.f32 %v688, %v877
        %879 = vmatprep.mubr.f32.mxu0 0.0
        %880 = vmatmul.mubr.f32.gmra.mxu0 %v743
        %v881 = vpop.f32.mrf.mxu0
        %v882 = vadd.f32 %v684, %v881
        %v883 = vpop.f32.mrf.mxu0
        %v884 = vadd.f32 %v688, %v883
        %885 = vmatprep.mubr.f32.mxu0 0.0
        %886 = vmatmul.mubr.f32.gmra.mxu0 %v745
        %v887 = vpop.f32.mrf.mxu0
        %v888 = vadd.f32 %v684, %v887
        %v889 = vpop.f32.mrf.mxu0
        %v890 = vadd.f32 %v688, %v889
        %891 = vmatprep.mubr.f32.mxu0 0.0
        %892 = vmatmul.mubr.f32.gmra.mxu0 %v747
        %v893 = vpop.f32.mrf.mxu0
        %v894 = vadd.f32 %v684, %v893
        %v895 = vpop.f32.mrf.mxu0
        %v896 = vadd.f32 %v688, %v895
        %897 = vmatprep.mubr.f32.mxu0 0.0
        %898 = vmatmul.mubr.f32.gmra.mxu0 %v749
        %v899 = vpop.f32.mrf.mxu0
        %v900 = vadd.f32 %v684, %v899
        %v901 = vpop.f32.mrf.mxu0
        %v902 = vadd.f32 %v688, %v901
        %903 = vmatprep.mubr.f32.mxu0 0.0
        %904 = vmatmul.mubr.f32.gmra.mxu0 %v751
        %v905 = vpop.f32.mrf.mxu0
        %v906 = vadd.f32 %v684, %v905
        %v907 = vpop.f32.mrf.mxu0
        %v908 = vadd.f32 %v688, %v907
        %909 = vmatprep.mubr.f32.mxu0 0.0
        %910 = vmatmul.mubr.f32.gmra.mxu0 %v753
        %v911 = vpop.f32.mrf.mxu0
        %v912 = vadd.f32 %v684, %v911
        %v913 = vpop.f32.mrf.mxu0
        %v914 = vadd.f32 %v688, %v913
        %915 = vmatprep.mubr.f32.mxu0 0.0
        %916 = vmatmul.mubr.f32.gmra.mxu0 %v755
        %v917 = vpop.f32.mrf.mxu0
        %v918 = vadd.f32 %v684, %v917
        %v919 = vpop.f32.mrf.mxu0
        %v920 = vadd.f32 %v688, %v919
        %921 = vdwg.mxu0
        %v922 = vmax.f32 %v828, 0.0
        %v923 = vmax.f32 %v830, 0.0
        %v924 = vmax.f32 %v834, 0.0
        %v925 = vmax.f32 %v836, 0.0
        %v926 = vmax.f32 %v840, 0.0
        %v927 = vmax.f32 %v842, 0.0
        %v928 = vmax.f32 %v846, 0.0
        %v929 = vmax.f32 %v848, 0.0
        %v930 = vmax.f32 %v852, 0.0
        %v931 = vmax.f32 %v854, 0.0
        %v932 = vmax.f32 %v858, 0.0
        %v933 = vmax.f32 %v860, 0.0
        %v934 = vmax.f32 %v864, 0.0
        %v935 = vmax.f32 %v866, 0.0
        %v936 = vmax.f32 %v870, 0.0
        %v937 = vmax.f32 %v872, 0.0
        %v938 = vmax.f32 %v876, 0.0
        %v939 = vmax.f32 %v878, 0.0
        %v940 = vmax.f32 %v882, 0.0
        %v941 = vmax.f32 %v884, 0.0
        %v942 = vmax.f32 %v888, 0.0
        %v943 = vmax.f32 %v890, 0.0
        %v944 = vmax.f32 %v894, 0.0
        %v945 = vmax.f32 %v896, 0.0
        %v946 = vmax.f32 %v900, 0.0
        %v947 = vmax.f32 %v902, 0.0
        %v948 = vmax.f32 %v906, 0.0
        %v949 = vmax.f32 %v908, 0.0
        %v950 = vmax.f32 %v912, 0.0
        %v951 = vmax.f32 %v914, 0.0
        %v952 = vmax.f32 %v918, 0.0
        %v953 = vmax.f32 %v920, 0.0
        %s954 = scalar_lea.vmem [#allocation2], 1
        %v955 = vld [vmem:[%s954] ss:$2 sm:$0x3]
        %v956 = vadd.f32 %v922, %v924
        %v957 = vadd.f32 %v956, %v926
        %v958 = vadd.f32 %v957, %v928
        %v959 = vadd.f32 %v958, %v930
        %v960 = vadd.f32 %v959, %v932
        %v961 = vadd.f32 %v960, %v934
        %v962 = vadd.f32 %v961, %v936
        %v963 = vadd.f32 %v962, %v938
        %v964 = vadd.f32 %v963, %v940
        %v965 = vadd.f32 %v964, %v942
        %v966 = vadd.f32 %v965, %v944
        %v967 = vadd.f32 %v966, %v946
        %v968 = vadd.f32 %v967, %v948
        %v969 = vadd.f32 %v968, %v950
        %v970 = vadd.f32 %v969, %v952
        %v971 = vrot.slane %v970, 4
        %v972 = vadd.f32 %v970, %v971
        %v973 = vrot.slane %v972, 2
        %v974 = vadd.f32 %v972, %v973
        %v975 = vrot.slane %v974, 1
        %v976 = vadd.f32 %v974, %v975
        %v977 = vadd.f32 %v923, %v925
        %v978 = vadd.f32 %v977, %v927
        %v979 = vadd.f32 %v978, %v929
        %v980 = vadd.f32 %v979, %v931
        %v981 = vadd.f32 %v980, %v933
        %v982 = vadd.f32 %v981, %v935
        %v983 = vadd.f32 %v982, %v937
        %v984 = vadd.f32 %v983, %v939
        %v985 = vadd.f32 %v984, %v941
        %v986 = vadd.f32 %v985, %v943
        %v987 = vadd.f32 %v986, %v945
        %v988 = vadd.f32 %v987, %v947
        %v989 = vadd.f32 %v988, %v949
        %v990 = vadd.f32 %v989, %v951
        %v991 = vadd.f32 %v990, %v953
        %v992 = vrot.slane %v991, 4
        %v993 = vadd.f32 %v991, %v992
        %v994 = vrot.slane %v993, 2
        %v995 = vadd.f32 %v993, %v994
        %v996 = vrot.slane %v995, 1
        %v997 = vadd.f32 %v995, %v996
        %v1000 = vcombine.low %v976, %v997
        %v1002 = vunpack.c.l.s4 1966171168
        %v1003 = vunpack.c.0.s8 %v1002
        %v1004 = vlaneseq
        %v1005 = vshrl.u32 %v1004, 7
        %v1006 = vsub.s32 %v1003, %v1005
        %v1007 = vrot.slane %v1000, %v1006
        %v1009 = vunpack.c.l.s4 1966171168
        %v1010 = vunpack.c.0.s8 %v1009
        %v1011 = vlaneseq
        %v1012 = vshrl.u32 %v1011, 7
        %v1013 = vsub.s32 %v1010, %v1012
        %v1014 = vrot.slane %v1007, %v1013
        %v1016 = vadd.f32 %v955, %v1014
        %1017 = vst.msk [vmem:[%s954] ss:$2 sm:$0x3] %vm676, %v1016
        %p1018 = scmp.eq.s32.totalorder %s23, 1
        // Predicated region
        $region65: #{tpu_custom_call.1} parent=47 // pred_check
          %p1019 = pneg %p1018
        $region66: #{tpu_custom_call.1} parent=47 // pred_check_branch
          %1021 = sbr.rel (%p1019) target = $region68
        $region67: #{tpu_custom_call.1} parent=47 // pred_region
          %v1022 = vld [vmem:[#allocation2] sm:$0xf]
          %v1023 = vmul.f32 %v1022, 0.00390625
          %v1026 = vunpack.c.l.s4 1983009808
          %v1027 = vunpack.c.0.s8 %v1026
          %v1028 = vlaneseq
          %v1029 = vshrl.u32 %v1028, 7
          %v1030 = vsub.s32 %v1027, %v1029
          %v1031 = vrot.slane %v1023, %v1030
          %v1032 = vcombine.high %v1031, %v1031
          %vm1035 = vcmask 1041408
          %v1036 = vsel %vm1035, %v1031, 0.0
          %v1037 = vrot.slane %v1036, 4
          %v1038 = vadd.f32 %v1036, %v1037
          %v1039 = vrot.slane %v1038, 2
          %v1040 = vadd.f32 %v1038, %v1039
          %v1041 = vrot.slane %v1040, 1
          %v1042 = vadd.f32 %v1040, %v1041
          %v1043 = vsel %vm1035, %v1032, 0.0
          %v1044 = vrot.slane %v1043, 4
          %v1045 = vadd.f32 %v1043, %v1044
          %v1046 = vrot.slane %v1045, 2
          %v1047 = vadd.f32 %v1045, %v1046
          %v1048 = vrot.slane %v1047, 1
          %v1049 = vadd.f32 %v1047, %v1048
          %v1050 = vrcp.pop 2.0
          %v1051 = vmul.f32 %v1042, %v1050
          %v1052 = vmul.f32 %v1049, %v1050
          %v1053 = vmul.f32 %v1023, %v1023
          %v1056 = vunpack.c.l.s4 1983009808
          %v1057 = vunpack.c.0.s8 %v1056
          %v1058 = vlaneseq
          %v1059 = vshrl.u32 %v1058, 7
          %v1060 = vsub.s32 %v1057, %v1059
          %v1061 = vrot.slane %v1053, %v1060
          %v1062 = vcombine.high %v1061, %v1061
          %v1065 = vsel %vm1035, %v1061, 0.0
          %v1066 = vrot.slane %v1065, 4
          %v1067 = vadd.f32 %v1065, %v1066
          %v1068 = vrot.slane %v1067, 2
          %v1069 = vadd.f32 %v1067, %v1068
          %v1070 = vrot.slane %v1069, 1
          %v1071 = vadd.f32 %v1069, %v1070
          %v1072 = vsel %vm1035, %v1062, 0.0
          %v1073 = vrot.slane %v1072, 4
          %v1074 = vadd.f32 %v1072, %v1073
          %v1075 = vrot.slane %v1074, 2
          %v1076 = vadd.f32 %v1074, %v1075
          %v1077 = vrot.slane %v1076, 1
          %v1078 = vadd.f32 %v1076, %v1077
          %v1079 = vmul.f32 %v1071, %v1050
          %v1080 = vmul.f32 %v1078, %v1050
          %v1081 = vmul.f32 %v1051, %v1051
          %v1082 = vmul.f32 %v1052, %v1052
          %v1083 = vsub.f32 %v1079, %v1081
          %v1084 = vsub.f32 %v1080, %v1082
          %v1085 = vmax.f32 %v1083, 0.0
          %v1086 = vmax.f32 %v1084, 0.0
          %v1089 = vcombine.low %v1051, %v1052
          %v1091 = vunpack.c.l.s4 1983009808
          %v1092 = vunpack.c.0.s8 %v1091
          %v1093 = vlaneseq
          %v1094 = vshrl.u32 %v1093, 7
          %v1095 = vsub.s32 %v1092, %v1094
          %v1096 = vrot.slane %v1089, %v1095
          %v1098 = vsub.f32 %v1023, %v1096
          %v1099 = vadd.f32 %v1085, 1e-05
          %v1100 = vadd.f32 %v1086, 1e-05
          %v1101 = vrsqrt.pop %v1099
          %v1102 = vrsqrt.pop %v1100
          %v1105 = vcombine.low %v1101, %v1102
          %v1107 = vunpack.c.l.s4 1983009808
          %v1108 = vunpack.c.0.s8 %v1107
          %v1109 = vlaneseq
          %v1110 = vshrl.u32 %v1109, 7
          %v1111 = vsub.s32 %v1108, %v1110
          %v1112 = vrot.slane %v1105, %v1111
          %v1114 = vmul.f32 %v1098, %v1112
          %v1115 = vld [vmem:[%s3] sm:$0x3]
          %v1117 = vlaneseq
          %v1118 = vshrl.u32 %v1117, 7
          %v1119 = vsub.s32 0, %v1118
          %v1120 = vrot.slane %v1115, %v1119
          %v1121 = vlaneseq
          %v1122 = vshrl.u32 %v1121, 7
          %v1123 = vsub.s32 1, %v1122
          %v1124 = vrot.slane %v1115, %v1123
          %v1125 = vcombine.low %v1120, %v1124
          %v1127 = vunpack.c.l.s4 1983009808
          %v1128 = vunpack.c.0.s8 %v1127
          %v1129 = vlaneseq
          %v1130 = vshrl.u32 %v1129, 7
          %v1131 = vsub.s32 %v1128, %v1130
          %v1132 = vrot.slane %v1125, %v1131
          %v1134 = vmul.f32 %v1114, %v1132
          %v1135 = vld [vmem:[%s4] sm:$0x3]
          %v1137 = vlaneseq
          %v1138 = vshrl.u32 %v1137, 7
          %v1139 = vsub.s32 0, %v1138
          %v1140 = vrot.slane %v1135, %v1139
          %v1141 = vlaneseq
          %v1142 = vshrl.u32 %v1141, 7
          %v1143 = vsub.s32 1, %v1142
          %v1144 = vrot.slane %v1135, %v1143
          %v1145 = vcombine.low %v1140, %v1144
          %v1147 = vunpack.c.l.s4 1983009808
          %v1148 = vunpack.c.0.s8 %v1147
          %v1149 = vlaneseq
          %v1150 = vshrl.u32 %v1149, 7
          %v1151 = vsub.s32 %v1148, %v1150
          %v1152 = vrot.slane %v1145, %v1151
          %v1154 = vadd.f32 %v1134, %v1152
          %v1157 = vunpack.c.l.s4 1983009808
          %v1158 = vunpack.c.0.s8 %v1157
          %v1159 = vlaneseq
          %v1160 = vshrl.u32 %v1159, 7
          %v1161 = vsub.s32 %v1158, %v1160
          %v1162 = vrot.slane %v1154, %v1161
          %v1163 = vcombine.high %v1162, %v1162
          %v1166 = vpack.c.bf16 %v1162, %v1162
          %v1167 = vpack.c.bf16 %v1163, %v1163
          %v1168 = vld [vmem:[#allocation8] sm:$0xf]
          %v1169 = vld [vmem:[#allocation8 + $0x4] sm:$0xf]
          %v1170 = vld [vmem:[#allocation8 + $0x8] sm:$0xf]
          %v1171 = vld [vmem:[#allocation8 + $0xc] sm:$0xf]
          %v1172 = vld [vmem:[#allocation8 + $0x10] sm:$0xf]
          %v1173 = vld [vmem:[#allocation8 + $0x14] sm:$0xf]
          %v1174 = vld [vmem:[#allocation8 + $0x18] sm:$0xf]
          %v1175 = vld [vmem:[#allocation8 + $0x1c] sm:$0xf]
          %v1176 = vld [vmem:[#allocation8 + $0x20] sm:$0xf]
          %v1177 = vld [vmem:[#allocation8 + $0x24] sm:$0xf]
          %v1178 = vld [vmem:[#allocation8 + $0x28] sm:$0xf]
          %v1179 = vld [vmem:[#allocation8 + $0x2c] sm:$0xf]
          %v1180 = vld [vmem:[#allocation8 + $0x30] sm:$0xf]
          %v1181 = vld [vmem:[#allocation8 + $0x34] sm:$0xf]
          %v1182 = vld [vmem:[#allocation8 + $0x38] sm:$0xf]
          %v1183 = vld [vmem:[#allocation8 + $0x3c] sm:$0xf]
          %v1184 = vld [vmem:[#allocation8 + $0x40] sm:$0xf]
          %v1185 = vld [vmem:[#allocation8 + $0x44] sm:$0xf]
          %v1186 = vld [vmem:[#allocation8 + $0x48] sm:$0xf]
          %v1187 = vld [vmem:[#allocation8 + $0x4c] sm:$0xf]
          %v1188 = vld [vmem:[#allocation8 + $0x50] sm:$0xf]
          %v1189 = vld [vmem:[#allocation8 + $0x54] sm:$0xf]
          %v1190 = vld [vmem:[#allocation8 + $0x58] sm:$0xf]
          %v1191 = vld [vmem:[#allocation8 + $0x5c] sm:$0xf]
          %v1192 = vld [vmem:[#allocation8 + $0x60] sm:$0xf]
          %v1193 = vld [vmem:[#allocation8 + $0x64] sm:$0xf]
          %v1194 = vld [vmem:[#allocation8 + $0x68] sm:$0xf]
          %v1195 = vld [vmem:[#allocation8 + $0x6c] sm:$0xf]
          %v1196 = vld [vmem:[#allocation8 + $0x70] sm:$0xf]
          %v1197 = vld [vmem:[#allocation8 + $0x74] sm:$0xf]
          %v1198 = vld [vmem:[#allocation8 + $0x78] sm:$0xf]
          %v1199 = vld [vmem:[#allocation8 + $0x7c] sm:$0xf]
          %v1200 = vld [vmem:[%s6] sm:$0x1]
          %v1202 = vlaneseq
          %v1203 = vshrl.u32 %v1202, 7
          %v1204 = vsub.s32 0, %v1203
          %v1205 = vrot.slane %v1200, %v1204
          %v1239 = vunpack.c.l.b16 %v1168
          %v1240 = vunpack.c.l.b16 %v1169
          %v1241 = vunpack.c.l.b16 %v1170
          %v1242 = vunpack.c.l.b16 %v1171
          %v1243 = vunpack.c.l.b16 %v1172
          %v1244 = vunpack.c.l.b16 %v1173
          %v1245 = vunpack.c.l.b16 %v1174
          %v1246 = vunpack.c.l.b16 %v1175
          %v1247 = vunpack.c.l.b16 %v1176
          %v1248 = vunpack.c.l.b16 %v1177
          %v1249 = vunpack.c.l.b16 %v1178
          %v1250 = vunpack.c.l.b16 %v1179
          %v1251 = vunpack.c.l.b16 %v1180
          %v1252 = vunpack.c.l.b16 %v1181
          %v1253 = vunpack.c.l.b16 %v1182
          %v1254 = vunpack.c.l.b16 %v1183
          %v1255 = vunpack.c.l.b16 %v1184
          %v1256 = vunpack.c.l.b16 %v1185
          %v1257 = vunpack.c.l.b16 %v1186
          %v1258 = vunpack.c.l.b16 %v1187
          %v1259 = vunpack.c.l.b16 %v1188
          %v1260 = vunpack.c.l.b16 %v1189
          %v1261 = vunpack.c.l.b16 %v1190
          %v1262 = vunpack.c.l.b16 %v1191
          %v1263 = vunpack.c.l.b16 %v1192
          %v1264 = vunpack.c.l.b16 %v1193
          %v1265 = vunpack.c.l.b16 %v1194
          %v1266 = vunpack.c.l.b16 %v1195
          %v1267 = vunpack.c.l.b16 %v1196
          %v1268 = vunpack.c.l.b16 %v1197
          %v1269 = vunpack.c.l.b16 %v1198
          %v1270 = vunpack.c.l.b16 %v1199
          %v1271 = vpack.c.b16 %v1240, %v1239
          %v1272 = vpack.c.b16 %v1242, %v1241
          %v1273 = vpack.c.b16 %v1244, %v1243
          %v1274 = vpack.c.b16 %v1246, %v1245
          %v1275 = vpack.c.b16 %v1248, %v1247
          %v1276 = vpack.c.b16 %v1250, %v1249
          %v1277 = vpack.c.b16 %v1252, %v1251
          %v1278 = vpack.c.b16 %v1254, %v1253
          %v1279 = vpack.c.b16 %v1256, %v1255
          %v1280 = vpack.c.b16 %v1258, %v1257
          %v1281 = vpack.c.b16 %v1260, %v1259
          %v1282 = vpack.c.b16 %v1262, %v1261
          %v1283 = vpack.c.b16 %v1264, %v1263
          %v1284 = vpack.c.b16 %v1266, %v1265
          %v1285 = vpack.c.b16 %v1268, %v1267
          %v1286 = vpack.c.b16 %v1270, %v1269
          %1303 = vmatprep.subr.bf16.mxu0 0
          %1304 = vmatpush1.bf16.msra.mxu0 %v1278
          %1305 = vmatprep.subr.bf16.mxu0 0
          %1306 = vmatpush1.bf16.msra.mxu0 %v1277
          %1307 = vmatprep.subr.bf16.mxu0 0
          %1308 = vmatpush1.bf16.msra.mxu0 %v1276
          %1309 = vmatprep.subr.bf16.mxu0 0
          %1310 = vmatpush1.bf16.msra.mxu0 %v1275
          %1311 = vmatprep.subr.bf16.mxu0 0
          %1312 = vmatpush1.bf16.msra.mxu0 %v1274
          %1313 = vmatprep.subr.bf16.mxu0 0
          %1314 = vmatpush1.bf16.msra.mxu0 %v1273
          %1315 = vmatprep.subr.bf16.mxu0 0
          %1316 = vmatpush1.bf16.msra.mxu0 %v1272
          %1317 = vmatprep.subr.bf16.mxu0 0
          %1318 = vmatpush1.bf16.msra.mxu0 %v1271
          %1319 = vmatprep.subr.bf16.mxu0 0
          %1320 = vmatpush2.bf16.msra.mxu0 %v1286
          %1321 = vmatprep.subr.bf16.mxu0 0
          %1322 = vmatpush2.bf16.msra.mxu0 %v1285
          %1323 = vmatprep.subr.bf16.mxu0 0
          %1324 = vmatpush2.bf16.msra.mxu0 %v1284
          %1325 = vmatprep.subr.bf16.mxu0 0
          %1326 = vmatpush2.bf16.msra.mxu0 %v1283
          %1327 = vmatprep.subr.bf16.mxu0 0
          %1328 = vmatpush2.bf16.msra.mxu0 %v1282
          %1329 = vmatprep.subr.bf16.mxu0 0
          %1330 = vmatpush2.bf16.msra.mxu0 %v1281
          %1331 = vmatprep.subr.bf16.mxu0 0
          %1332 = vmatpush2.bf16.msra.mxu0 %v1280
          %1333 = vmatprep.subr.bf16.mxu0 0
          %1334 = vmatpush2.bf16.msra.mxu0 %v1279
          %1335 = vmatprep.mubr.bf16.mxu0 %v1167
          %1336 = vmatmul.mubr.bf16.gmra.mxu0 %v1166
          %v1337 = vpop.f32.mrf.mxu0
          %v1338 = vadd.f32 %v1205, %v1337
          %v1339 = vpop.f32.mrf.mxu0
          %v1340 = vpop.f32.mrf.mxu0
          %v1341 = vpop.f32.mrf.mxu0
          %1342 = vdwg.mxu0
          %1343 = vst [vmem:[#allocation9] sm:$0x3] %v1338
        $region68: #{tpu_custom_call.1} parent=47 // pred_fallthru
          _
        // Predicated region
        $region69: #{tpu_custom_call.1} parent=47 // pred_check
          %p1344 = pneg %p188
        $region70: #{tpu_custom_call.1} parent=47 // pred_check_branch
          %1346 = sbr.rel (%p1344) target = $region72
        $region71: #{tpu_custom_call.1} parent=47 // pred_region
          %s1348 = ssub.s32 32, 32
          %1349 = vsyncadd [#allocation5], %s1348
          %s1351 = sshll.u32 [#allocation9], 4
          %s1352 = int_to_ptr.vmem [resolvable:$true] %s1351
          %1354 = dma.vmem_to_hbm [thread:$0]  %s1352, 32, %s7, [#allocation5]
        $region72: #{tpu_custom_call.1} parent=47 // pred_fallthru
          _
        // Predicated region
        $region73: #{tpu_custom_call.1} parent=47 // pred_check
          %p1355 = pneg %p188
        $region74: #{tpu_custom_call.1} parent=47 // pred_check_branch
          %1357 = sbr.rel (%p1355) target = $region76
        $region75: #{tpu_custom_call.1} parent=47 // pred_region
          %1358 = dma.done [#allocation5], 32
        $region76: #{tpu_custom_call.1} parent=47 // pred_fallthru
          _
      $region48: #{tpu_custom_call.1} parent=5 // pred_fallthru
        _
      %p1359 = scmp.le.s32.totalorder 2, %s18
      // Predicated region
      $region77: #{tpu_custom_call.1} parent=5 // pred_check
        %p1360 = pneg %p1359
      $region78: #{tpu_custom_call.1} parent=5 // pred_check_branch
        %1362 = sbr.rel (%p1360) target = $region80
      $region79: #{tpu_custom_call.1} parent=5 // pred_region
        %s1363 = ssub.s32 %s18, 2
      $region80: #{tpu_custom_call.1} parent=5 // pred_fallthru
        _
    $region6: #{tpu_custom_call.1} parent=1 // loop_footer
      %s22 = sadd.s32 1, %s18
    $region7: #{tpu_custom_call.1} parent=1 // loop_footer_branch
      %17 = sbr.rel target = $region3
    $region8: #{tpu_custom_call.1} parent=1 // loop_exit
      _
    %1364 = vsyncpa [#allocation4], 1
    %s1365 = scalar_lea.sflag [#allocation4], 1
    %1366 = vsyncpa %s1365, 1
    %1367 = vsyncpa [#allocation7], 1
    %1368 = vsyncpa [#allocation5], 1
    %s1369 = scalar_lea.sflag [#allocation5], 1
    %1370 = vsyncpa %s1369, 1

</llo_original>
